<compile_context>
chip_gen: v6e
topology: v6e:2x2x1
jax: 0.10.0
libtpu: 0.0.40
codegen_flags: <defaults>
</compile_context>

<pallas_src>
import jax
import jax.numpy as jnp
from jax.experimental import pallas as pl
from jax.experimental.pallas import tpu as pltpu


# ----- fused 4-layer kernel --------------------------------------------------

def _toy_fused_kernel(x_ref,
                      w1_ref, b1_ref,
                      w2_ref, b2_ref,
                      w3_ref, b3_ref,
                      w4_ref, b4_ref,
                      o_ref):
    """x -> (x@W1t+b1) -> (@W2t+b2) -> (@W3t+b3) -> (@W4t+b4), all in VMEM.

    Weights are pre-transposed to (K, N); biases are (1, N) rows that broadcast
    over the batch. Straight-line code keeps every matmul visible to the
    scheduler so the bias adds (VPU) overlap with the next MXU push.
    """
    h = jnp.dot(x_ref[...], w1_ref[...],
                preferred_element_type=jnp.float32) + b1_ref[...]
    h = jnp.dot(h, w2_ref[...],
                preferred_element_type=jnp.float32) + b2_ref[...]
    h = jnp.dot(h, w3_ref[...],
                preferred_element_type=jnp.float32) + b3_ref[...]
    o_ref[...] = (jnp.dot(h, w4_ref[...],
                          preferred_element_type=jnp.float32)
                  + b4_ref[...]).astype(o_ref.dtype)


def toy_model_pallas(x, params):
    """params = flat tuple (w1t, b1, w2t, b2, w3t, b3, w4t_pad, b4_pad).

    wNt are (K, N) pre-transposed weights; the last layer is zero-padded to a
    lane-dense output width (128). Returns the padded (M, 128) output; caller
    slices to the true output width.
    """
    M = x.shape[0]
    n_out_padded = params[-1].shape[-1]

    return pl.pallas_call(
        _toy_fused_kernel,
        out_shape=jax.ShapeDtypeStruct((M, n_out_padded), x.dtype),
        # No grid: every operand is a single full-array VMEM block.
        compiler_params=pltpu.CompilerParams(
            vmem_limit_bytes=32 * 1024 * 1024,
        ),
    )(x, *params)


# ----- ToyModel parameters & forward -----------------------------------------

# Scaled-down version of nn.Linear(10000,10000)/.../(20000,10)
D_IN, D_H1, D_H2, D_H3, D_OUT = 256, 256, 256, 512, 10
D_OUT_PAD = 128          # lane-dense padded width for the last layer
BATCH = 8


def init_raw_params(key):
    """Deterministic PyTorch-style init: U(-1/sqrt(fan_in), 1/sqrt(fan_in)).

    Returns weights in PyTorch (out_features, in_features) layout, for the
    pure-JAX reference.
    """
    dims = [(D_H1, D_IN), (D_H2, D_H1), (D_H3, D_H2), (D_OUT, D_H3)]
    raw = []
    for out_f, in_f in dims:
        key, kw, kb = jax.random.split(key, 3)
        bound = 1.0 / jnp.sqrt(in_f)
        w = jax.random.uniform(kw, (out_f, in_f), jnp.float32, -bound, bound)
        b = jax.random.uniform(kb, (out_f,), jnp.float32, -bound, bound)
        raw.append((w, b))
    return raw


def prepare_kernel_params(raw):
    """One-time transform: transpose to (K, N), reshape biases to (1, N),
    and zero-pad the final layer's output dim to D_OUT_PAD lanes."""
    (w1, b1), (w2, b2), (w3, b3), (w4, b4) = raw

    w1t, w2t, w3t = w1.T, w2.T, w3.T                       # (K, N)
    b1r, b2r, b3r = b1.reshape(1, -1), b2.reshape(1, -1), b3.reshape(1, -1)

    w4t = jnp.zeros((D_H3, D_OUT_PAD), jnp.float32).at[:, :D_OUT].set(w4.T)
    b4r = jnp.zeros((1, D_OUT_PAD), jnp.float32).at[:, :D_OUT].set(b4)

    return (w1t, b1r, w2t, b2r, w3t, b3r, w4t, b4r)


@jax.jit
def toy_model_forward(x, kernel_params):
    y_pad = toy_model_pallas(x, kernel_params)
    return y_pad[:, :D_OUT]


def toy_model_reference(x, raw_params):
    for w, b in raw_params:
        x = x @ w.T + b
    return x


if __name__ == "__main__":
    key = jax.random.PRNGKey(0)
    key, kx = jax.random.split(key)
    x = jax.random.normal(kx, (BATCH, D_IN), jnp.float32)

    raw_params = init_raw_params(key)
    kernel_params = prepare_kernel_params(raw_params)

    out = toy_model_forward(x, kernel_params)
    jax.block_until_ready(out)

    ref = toy_model_reference(x, raw_params)
    assert out.shape == (BATCH, D_OUT), out.shape
    assert jnp.allclose(out, ref, atol=1e-3, rtol=1e-3), "mismatch vs reference"

    print("KERNEL_OK")
</pallas_src>

<mosaic_0001>
module attributes {stable_mosaic.version = 11 : i64} {
  func.func @_toy_fused_kernel(%arg0: memref<8x256xf32, #tpu.memory_space<vmem>>, %arg1: memref<256x256xf32, #tpu.memory_space<vmem>>, %arg2: memref<1x256xf32, #tpu.memory_space<vmem>>, %arg3: memref<256x256xf32, #tpu.memory_space<vmem>>, %arg4: memref<1x256xf32, #tpu.memory_space<vmem>>, %arg5: memref<256x512xf32, #tpu.memory_space<vmem>>, %arg6: memref<1x512xf32, #tpu.memory_space<vmem>>, %arg7: memref<512x128xf32, #tpu.memory_space<vmem>>, %arg8: memref<1x128xf32, #tpu.memory_space<vmem>>, %arg9: memref<8x128xf32, #tpu.memory_space<vmem>>) attributes {dimension_semantics = [], scalar_prefetch = 0 : i64, scratch_operands = 0 : i64, tpu.core_type = #tpu.core_type<tc>} {
    %c0 = arith.constant 0 : index
    %c0_0 = arith.constant 0 : index
    %0 = vector.load %arg0[%c0, %c0_0] : memref<8x256xf32, #tpu.memory_space<vmem>>, vector<8x256xf32>
    %c0_1 = arith.constant 0 : index
    %c0_2 = arith.constant 0 : index
    %1 = vector.load %arg1[%c0_1, %c0_2] : memref<256x256xf32, #tpu.memory_space<vmem>>, vector<256x256xf32>
    %cst = arith.constant dense<0.000000e+00> : vector<8x256xf32>
    %2 = tpu.matmul %0, %1, %cst {dimension_numbers = #tpu.dot_dimension_numbers<[1], [0], [0], [1], [0, 0, 1, 1], [], []>} : vector<8x256xf32>, vector<256x256xf32>, vector<8x256xf32> -> vector<8x256xf32>
    %c0_3 = arith.constant 0 : index
    %c0_4 = arith.constant 0 : index
    %3 = vector.load %arg2[%c0_3, %c0_4] : memref<1x256xf32, #tpu.memory_space<vmem>>, vector<1x256xf32>
    %4 = vector.broadcast %3 : vector<1x256xf32> to vector<8x256xf32>
    %5 = arith.addf %2, %4 : vector<8x256xf32>
    %c0_5 = arith.constant 0 : index
    %c0_6 = arith.constant 0 : index
    %6 = vector.load %arg3[%c0_5, %c0_6] : memref<256x256xf32, #tpu.memory_space<vmem>>, vector<256x256xf32>
    %cst_7 = arith.constant dense<0.000000e+00> : vector<8x256xf32>
    %7 = tpu.matmul %5, %6, %cst_7 {dimension_numbers = #tpu.dot_dimension_numbers<[1], [0], [0], [1], [0, 0, 1, 1], [], []>} : vector<8x256xf32>, vector<256x256xf32>, vector<8x256xf32> -> vector<8x256xf32>
    %c0_8 = arith.constant 0 : index
    %c0_9 = arith.constant 0 : index
    %8 = vector.load %arg4[%c0_8, %c0_9] : memref<1x256xf32, #tpu.memory_space<vmem>>, vector<1x256xf32>
    %9 = vector.broadcast %8 : vector<1x256xf32> to vector<8x256xf32>
    %10 = arith.addf %7, %9 : vector<8x256xf32>
    %c0_10 = arith.constant 0 : index
    %c0_11 = arith.constant 0 : index
    %11 = vector.load %arg5[%c0_10, %c0_11] : memref<256x512xf32, #tpu.memory_space<vmem>>, vector<256x512xf32>
    %cst_12 = arith.constant dense<0.000000e+00> : vector<8x512xf32>
    %12 = tpu.matmul %10, %11, %cst_12 {dimension_numbers = #tpu.dot_dimension_numbers<[1], [0], [0], [1], [0, 0, 1, 1], [], []>} : vector<8x256xf32>, vector<256x512xf32>, vector<8x512xf32> -> vector<8x512xf32>
    %c0_13 = arith.constant 0 : index
    %c0_14 = arith.constant 0 : index
    %13 = vector.load %arg6[%c0_13, %c0_14] : memref<1x512xf32, #tpu.memory_space<vmem>>, vector<1x512xf32>
    %14 = vector.broadcast %13 : vector<1x512xf32> to vector<8x512xf32>
    %15 = arith.addf %12, %14 : vector<8x512xf32>
    %c0_15 = arith.constant 0 : index
    %c0_16 = arith.constant 0 : index
    %16 = vector.load %arg7[%c0_15, %c0_16] : memref<512x128xf32, #tpu.memory_space<vmem>>, vector<512x128xf32>
    %cst_17 = arith.constant dense<0.000000e+00> : vector<8x128xf32>
    %17 = tpu.matmul %15, %16, %cst_17 {dimension_numbers = #tpu.dot_dimension_numbers<[1], [0], [0], [1], [0, 0, 1, 1], [], []>} : vector<8x512xf32>, vector<512x128xf32>, vector<8x128xf32> -> vector<8x128xf32>
    %c0_18 = arith.constant 0 : index
    %c0_19 = arith.constant 0 : index
    %18 = vector.load %arg8[%c0_18, %c0_19] : memref<1x128xf32, #tpu.memory_space<vmem>>, vector<1x128xf32>
    %19 = vector.broadcast %18 : vector<1x128xf32> to vector<8x128xf32>
    %20 = arith.addf %17, %19 : vector<8x128xf32>
    %c0_20 = arith.constant 0 : index
    %c0_21 = arith.constant 0 : index
    %21 = vector.load %arg9[%c0_20, %c0_21] : memref<8x128xf32, #tpu.memory_space<vmem>>, vector<8x128xf32>
    tpu.vector_store %arg9[%c0_20, %c0_21], %20 {strides = array<i32>} : memref<8x128xf32, #tpu.memory_space<vmem>>, vector<8x128xf32>,
    return
  }
}

</mosaic_0001>

<llo_original>
// kernel: toy_model_forward.1
$region0: #{toy_model_forward.1}
  #allocation0 [shape = 'u32[]', space=smem, size = 0x4, offset = 0x4, fixed_abs, tag = 'smem constant byte address 0x4 - core index']
  #allocation1 [shape = 'u32[144,128]{1,0:T(1,128)}', space=vmem, size = 0x12000, scoped, tag = 'internal scratch']
  %s0 = inlined_call_operand.hbm [shape: f32[8,256], index: 0, kind: input, shape index: {}]
  %s1 = inlined_call_operand.hbm [shape: f32[256,256], index: 1, kind: input, shape index: {}]
  %s2 = inlined_call_operand.vmem [shape: f32[1,256], index: 2, kind: input, shape index: {}]
  %s3 = inlined_call_operand.hbm [shape: f32[256,256], index: 3, kind: input, shape index: {}]
  %s4 = inlined_call_operand.hbm [shape: f32[1,256], index: 4, kind: input, shape index: {}]
  %s5 = inlined_call_operand.hbm [shape: f32[256,512], index: 5, kind: input, shape index: {}]
  %s6 = inlined_call_operand.vmem [shape: f32[1,512], index: 6, kind: input, shape index: {}]
  %s7 = inlined_call_operand.hbm [shape: f32[512,128], index: 7, kind: input, shape index: {}]
  %s8 = inlined_call_operand.vmem [shape: f32[1,128], index: 8, kind: input, shape index: {}]
  %s9 = inlined_call_operand.hbm [shape: f32[8,128], index: 9, kind: output, shape index: {}]
  %s10 = sld [smem:[#allocation0]]
  $region70: #{toy_model_forward.1} parent=0
    _
  %s12 = ssub.s32 1, %s10
  %s13 = scalar_select 0, %s12, %s10
  $region1: #{toy_model_forward.1} parent=0
    #allocation2 [shape = 'u8[8192]{0}', space=vmem, size = 0x2000, scoped, tag = 'input window, operand 0, single buffered']
    #allocation3 [shape = 's32[1]{0}', space=sflag, size = 0x4, scoped, tag = 'scoped memory for toy_model_forward.1']
    #allocation4 [shape = 's32[1]{0}', space=sflag, size = 0x4, scoped, tag = 'scoped memory for toy_model_forward.1']
    #allocation5 [shape = 'u8[262144]{0}', space=vmem, size = 0x40000, scoped, tag = 'input window, operand 1, single buffered']
    #allocation6 [shape = 's32[1]{0}', space=sflag, size = 0x4, scoped, tag = 'scoped memory for toy_model_forward.1']
    #allocation7 [shape = 'u8[262144]{0}', space=vmem, size = 0x40000, scoped, tag = 'input window, operand 3, single buffered']
    #allocation8 [shape = 'u8[1024]{0}', space=vmem, size = 0x400, scoped, tag = 'input window, operand 4, single buffered']
    #allocation9 [shape = 's32[1]{0}', space=sflag, size = 0x4, scoped, tag = 'scoped memory for toy_model_forward.1']
    #allocation10 [shape = 'u8[524288]{0}', space=vmem, size = 0x80000, scoped, tag = 'input window, operand 5, single buffered']
    #allocation11 [shape = 'u8[262144]{0}', space=vmem, size = 0x40000, scoped, tag = 'input window, operand 7, single buffered']
    #allocation12 [shape = 's32[1]{0}', space=sflag, size = 0x4, scoped, tag = 'scoped memory for toy_model_forward.1']
    #allocation13 [shape = 'u8[4096]{0}', space=vmem, size = 0x1000, scoped, tag = 'output window, operand 0, single buffered']
    %14 = vsyncpa [#allocation3], 0
    %15 = vsyncpa [#allocation6], 0
    %16 = vsyncpa [#allocation9], 0
    %17 = vsyncpa [#allocation12], 0
    %18 = vsyncpa [#allocation4], 0
    // Predicated region
    $region2: #{toy_model_forward.1} parent=1 // pred_check
      _
    $region3: #{toy_model_forward.1} parent=1 // pred_check_branch
      %20 = sbr.rel (0) target = $region5
    $region4: #{toy_model_forward.1} parent=1 // pred_region
      %s22 = ssub.s32 256, 256
      %23 = vsyncadd [#allocation3], %s22
      %s25 = sshll.u32 [#allocation2], 4
      %s26 = int_to_ptr.vmem [resolvable:$true] %s25
      %28 = dma.hbm_to_vmem [thread:$0]  %s0, 256, %s26, [#allocation3]
    $region5: #{toy_model_forward.1} parent=1 // pred_fallthru
      _
    // Predicated region
    $region6: #{toy_model_forward.1} parent=1 // pred_check
      _
    $region7: #{toy_model_forward.1} parent=1 // pred_check_branch
      %30 = sbr.rel (0) target = $region9
    $region8: #{toy_model_forward.1} parent=1 // pred_region
      %s32 = ssub.s32 8192, 8192
      %33 = vsyncadd [#allocation6], %s32
      %s34 = sshll.u32 [#allocation5], 4
      %s35 = int_to_ptr.vmem [resolvable:$true] %s34
      %40 = dma.hbm_to_vmem [thread:$0]  %s1, 8192, %s35, [#allocation6], 256, 256, 16
    $region9: #{toy_model_forward.1} parent=1 // pred_fallthru
      _
    // Predicated region
    $region10: #{toy_model_forward.1} parent=1 // pred_check
      _
    $region11: #{toy_model_forward.1} parent=1 // pred_check_branch
      %42 = sbr.rel (0) target = $region13
    $region12: #{toy_model_forward.1} parent=1 // pred_region
      _
    $region13: #{toy_model_forward.1} parent=1 // pred_fallthru
      _
    // Predicated region
    $region14: #{toy_model_forward.1} parent=1 // pred_check
      _
    $region15: #{toy_model_forward.1} parent=1 // pred_check_branch
      %44 = sbr.rel (0) target = $region17
    $region16: #{toy_model_forward.1} parent=1 // pred_region
      %s46 = ssub.s32 8192, 8192
      %47 = vsyncadd [#allocation6], %s46
      %s48 = sshll.u32 [#allocation7], 4
      %s49 = int_to_ptr.vmem [resolvable:$true] %s48
      %54 = dma.hbm_to_vmem [thread:$0]  %s3, 8192, %s49, [#allocation6], 256, 256, 16
    $region17: #{toy_model_forward.1} parent=1 // pred_fallthru
      _
    // Predicated region
    $region18: #{toy_model_forward.1} parent=1 // pred_check
      _
    $region19: #{toy_model_forward.1} parent=1 // pred_check_branch
      %56 = sbr.rel (0) target = $region21
    $region20: #{toy_model_forward.1} parent=1 // pred_region
      %s58 = ssub.s32 32, 32
      %59 = vsyncadd [#allocation9], %s58
      %s61 = sshll.u32 [#allocation8], 4
      %s62 = int_to_ptr.vmem [resolvable:$true] %s61
      %64 = dma.hbm_to_vmem [thread:$0]  %s4, 32, %s62, [#allocation9]
    $region21: #{toy_model_forward.1} parent=1 // pred_fallthru
      _
    // Predicated region
    $region22: #{toy_model_forward.1} parent=1 // pred_check
      _
    $region23: #{toy_model_forward.1} parent=1 // pred_check_branch
      %66 = sbr.rel (0) target = $region25
    $region24: #{toy_model_forward.1} parent=1 // pred_region
      %s68 = ssub.s32 16384, 16384
      %69 = vsyncadd [#allocation9], %s68
      %s70 = sshll.u32 [#allocation10], 4
      %s71 = int_to_ptr.vmem [resolvable:$true] %s70
      %76 = dma.hbm_to_vmem [thread:$0]  %s5, 16384, %s71, [#allocation9], 512, 512, 32
    $region25: #{toy_model_forward.1} parent=1 // pred_fallthru
      _
    // Predicated region
    $region26: #{toy_model_forward.1} parent=1 // pred_check
      _
    $region27: #{toy_model_forward.1} parent=1 // pred_check_branch
      %78 = sbr.rel (0) target = $region29
    $region28: #{toy_model_forward.1} parent=1 // pred_region
      _
    $region29: #{toy_model_forward.1} parent=1 // pred_fallthru
      _
    // Predicated region
    $region30: #{toy_model_forward.1} parent=1 // pred_check
      _
    $region31: #{toy_model_forward.1} parent=1 // pred_check_branch
      %80 = sbr.rel (0) target = $region33
    $region32: #{toy_model_forward.1} parent=1 // pred_region
      %s82 = ssub.s32 8192, 8192
      %83 = vsyncadd [#allocation12], %s82
      %s84 = sshll.u32 [#allocation11], 4
      %s85 = int_to_ptr.vmem [resolvable:$true] %s84
      %90 = dma.hbm_to_vmem [thread:$0]  %s7, 8192, %s85, [#allocation12], 128, 128, 8
    $region33: #{toy_model_forward.1} parent=1 // pred_fallthru
      _
    // Predicated region
    $region34: #{toy_model_forward.1} parent=1 // pred_check
      _
    $region35: #{toy_model_forward.1} parent=1 // pred_check_branch
      %92 = sbr.rel (0) target = $region37
    $region36: #{toy_model_forward.1} parent=1 // pred_region
      _
    $region37: #{toy_model_forward.1} parent=1 // pred_fallthru
      _
    // Predicated region
    $region38: #{toy_model_forward.1} parent=1 // pred_check
      _
    $region39: #{toy_model_forward.1} parent=1 // pred_check_branch
      %94 = sbr.rel (0) target = $region41
    $region40: #{toy_model_forward.1} parent=1 // pred_region
      %95 = dma.done [#allocation3], 256
    $region41: #{toy_model_forward.1} parent=1 // pred_fallthru
      _
    // Predicated region
    $region42: #{toy_model_forward.1} parent=1 // pred_check
      _
    $region43: #{toy_model_forward.1} parent=1 // pred_check_branch
      %97 = sbr.rel (0) target = $region45
    $region44: #{toy_model_forward.1} parent=1 // pred_region
      %98 = dma.done [#allocation6], 8192
    $region45: #{toy_model_forward.1} parent=1 // pred_fallthru
      _
    // Predicated region
    $region46: #{toy_model_forward.1} parent=1 // pred_check
      _
    $region47: #{toy_model_forward.1} parent=1 // pred_check_branch
      %100 = sbr.rel (0) target = $region49
    $region48: #{toy_model_forward.1} parent=1 // pred_region
      %101 = dma.done [#allocation6], 8192
    $region49: #{toy_model_forward.1} parent=1 // pred_fallthru
      _
    // Predicated region
    $region50: #{toy_model_forward.1} parent=1 // pred_check
      _
    $region51: #{toy_model_forward.1} parent=1 // pred_check_branch
      %103 = sbr.rel (0) target = $region53
    $region52: #{toy_model_forward.1} parent=1 // pred_region
      %104 = dma.done [#allocation9], 32
    $region53: #{toy_model_forward.1} parent=1 // pred_fallthru
      _
    // Predicated region
    $region54: #{toy_model_forward.1} parent=1 // pred_check
      _
    $region55: #{toy_model_forward.1} parent=1 // pred_check_branch
      %106 = sbr.rel (0) target = $region57
    $region56: #{toy_model_forward.1} parent=1 // pred_region
      %107 = dma.done [#allocation9], 16384
    $region57: #{toy_model_forward.1} parent=1 // pred_fallthru
      _
    // Predicated region
    $region58: #{toy_model_forward.1} parent=1 // pred_check
      _
    $region59: #{toy_model_forward.1} parent=1 // pred_check_branch
      %109 = sbr.rel (0) target = $region61
    $region60: #{toy_model_forward.1} parent=1 // pred_region
      %110 = dma.done [#allocation12], 8192
    $region61: #{toy_model_forward.1} parent=1 // pred_fallthru
      _
    %v111 = vld [vmem:[#allocation2] sm:$0xff]
    %v112 = vld [vmem:[#allocation2 + $0x8] sm:$0xff]
    %v113 = vld [vmem:[#allocation5] sm:$0xff]
    %v114 = vld [vmem:[#allocation5 + $0x8] sm:$0xff]
    %v115 = vld [vmem:[#allocation5 + $0x10] sm:$0xff]
    %v116 = vld [vmem:[#allocation5 + $0x18] sm:$0xff]
    %v117 = vld [vmem:[#allocation5 + $0x20] sm:$0xff]
    %v118 = vld [vmem:[#allocation5 + $0x28] sm:$0xff]
    %v119 = vld [vmem:[#allocation5 + $0x30] sm:$0xff]
    %v120 = vld [vmem:[#allocation5 + $0x38] sm:$0xff]
    %v121 = vld [vmem:[#allocation5 + $0x40] sm:$0xff]
    %v122 = vld [vmem:[#allocation5 + $0x48] sm:$0xff]
    %v123 = vld [vmem:[#allocation5 + $0x50] sm:$0xff]
    %v124 = vld [vmem:[#allocation5 + $0x58] sm:$0xff]
    %v125 = vld [vmem:[#allocation5 + $0x60] sm:$0xff]
    %v126 = vld [vmem:[#allocation5 + $0x68] sm:$0xff]
    %v127 = vld [vmem:[#allocation5 + $0x70] sm:$0xff]
    %v128 = vld [vmem:[#allocation5 + $0x78] sm:$0xff]
    %v129 = vld [vmem:[#allocation5 + $0x80] sm:$0xff]
    %v130 = vld [vmem:[#allocation5 + $0x88] sm:$0xff]
    %v131 = vld [vmem:[#allocation5 + $0x90] sm:$0xff]
    %v132 = vld [vmem:[#allocation5 + $0x98] sm:$0xff]
    %v133 = vld [vmem:[#allocation5 + $0xa0] sm:$0xff]
    %v134 = vld [vmem:[#allocation5 + $0xa8] sm:$0xff]
    %v135 = vld [vmem:[#allocation5 + $0xb0] sm:$0xff]
    %v136 = vld [vmem:[#allocation5 + $0xb8] sm:$0xff]
    %v137 = vld [vmem:[#allocation5 + $0xc0] sm:$0xff]
    %v138 = vld [vmem:[#allocation5 + $0xc8] sm:$0xff]
    %v139 = vld [vmem:[#allocation5 + $0xd0] sm:$0xff]
    %v140 = vld [vmem:[#allocation5 + $0xd8] sm:$0xff]
    %v141 = vld [vmem:[#allocation5 + $0xe0] sm:$0xff]
    %v142 = vld [vmem:[#allocation5 + $0xe8] sm:$0xff]
    %v143 = vld [vmem:[#allocation5 + $0xf0] sm:$0xff]
    %v144 = vld [vmem:[#allocation5 + $0xf8] sm:$0xff]
    %v145 = vld [vmem:[#allocation5 + $0x100] sm:$0xff]
    %v146 = vld [vmem:[#allocation5 + $0x108] sm:$0xff]
    %v147 = vld [vmem:[#allocation5 + $0x110] sm:$0xff]
    %v148 = vld [vmem:[#allocation5 + $0x118] sm:$0xff]
    %v149 = vld [vmem:[#allocation5 + $0x120] sm:$0xff]
    %v150 = vld [vmem:[#allocation5 + $0x128] sm:$0xff]
    %v151 = vld [vmem:[#allocation5 + $0x130] sm:$0xff]
    %v152 = vld [vmem:[#allocation5 + $0x138] sm:$0xff]
    %v153 = vld [vmem:[#allocation5 + $0x140] sm:$0xff]
    %v154 = vld [vmem:[#allocation5 + $0x148] sm:$0xff]
    %v155 = vld [vmem:[#allocation5 + $0x150] sm:$0xff]
    %v156 = vld [vmem:[#allocation5 + $0x158] sm:$0xff]
    %v157 = vld [vmem:[#allocation5 + $0x160] sm:$0xff]
    %v158 = vld [vmem:[#allocation5 + $0x168] sm:$0xff]
    %v159 = vld [vmem:[#allocation5 + $0x170] sm:$0xff]
    %v160 = vld [vmem:[#allocation5 + $0x178] sm:$0xff]
    %v161 = vld [vmem:[#allocation5 + $0x180] sm:$0xff]
    %v162 = vld [vmem:[#allocation5 + $0x188] sm:$0xff]
    %v163 = vld [vmem:[#allocation5 + $0x190] sm:$0xff]
    %v164 = vld [vmem:[#allocation5 + $0x198] sm:$0xff]
    %v165 = vld [vmem:[#allocation5 + $0x1a0] sm:$0xff]
    %v166 = vld [vmem:[#allocation5 + $0x1a8] sm:$0xff]
    %v167 = vld [vmem:[#allocation5 + $0x1b0] sm:$0xff]
    %v168 = vld [vmem:[#allocation5 + $0x1b8] sm:$0xff]
    %v169 = vld [vmem:[#allocation5 + $0x1c0] sm:$0xff]
    %v170 = vld [vmem:[#allocation5 + $0x1c8] sm:$0xff]
    %v171 = vld [vmem:[#allocation5 + $0x1d0] sm:$0xff]
    %v172 = vld [vmem:[#allocation5 + $0x1d8] sm:$0xff]
    %v173 = vld [vmem:[#allocation5 + $0x1e0] sm:$0xff]
    %v174 = vld [vmem:[#allocation5 + $0x1e8] sm:$0xff]
    %v175 = vld [vmem:[#allocation5 + $0x1f0] sm:$0xff]
    %v176 = vld [vmem:[#allocation5 + $0x1f8] sm:$0xff]
    %v177 = vld [vmem:[%s2] sm:$0x3]
    %v179 = vlaneseq
    %v180 = vshrl.u32 %v179, 7
    %v181 = vsub.s32 0, %v180
    %v182 = vrot.slane %v177, %v181
    %v183 = vlaneseq
    %v184 = vshrl.u32 %v183, 7
    %v185 = vsub.s32 1, %v184
    %v186 = vrot.slane %v177, %v185
    %189 = vmatprep.subr.mxu0 %v144
    %190 = vmatpush1.msra.mxu0 %v143
    %191 = vmatprep.subr.mxu0 %v142
    %192 = vmatpush1.msra.mxu0 %v141
    %193 = vmatprep.subr.mxu0 %v140
    %194 = vmatpush1.msra.mxu0 %v139
    %195 = vmatprep.subr.mxu0 %v138
    %196 = vmatpush1.msra.mxu0 %v137
    %197 = vmatprep.subr.mxu0 %v136
    %198 = vmatpush1.msra.mxu0 %v135
    %199 = vmatprep.subr.mxu0 %v134
    %200 = vmatpush1.msra.mxu0 %v133
    %201 = vmatprep.subr.mxu0 %v132
    %202 = vmatpush1.msra.mxu0 %v131
    %203 = vmatprep.subr.mxu0 %v130
    %204 = vmatpush1.msra.mxu0 %v129
    %205 = vmatprep.subr.mxu0 %v128
    %206 = vmatpush1.msra.mxu0 %v127
    %207 = vmatprep.subr.mxu0 %v126
    %208 = vmatpush1.msra.mxu0 %v125
    %209 = vmatprep.subr.mxu0 %v124
    %210 = vmatpush1.msra.mxu0 %v123
    %211 = vmatprep.subr.mxu0 %v122
    %212 = vmatpush1.msra.mxu0 %v121
    %213 = vmatprep.subr.mxu0 %v120
    %214 = vmatpush1.msra.mxu0 %v119
    %215 = vmatprep.subr.mxu0 %v118
    %216 = vmatpush1.msra.mxu0 %v117
    %217 = vmatprep.subr.mxu0 %v116
    %218 = vmatpush1.msra.mxu0 %v115
    %219 = vmatprep.subr.mxu0 %v114
    %220 = vmatpush1.msra.mxu0 %v113
    %221 = vmatprep.subr.mxu0 %v176
    %222 = vmatpush2.msra.mxu0 %v175
    %223 = vmatprep.subr.mxu0 %v174
    %224 = vmatpush2.msra.mxu0 %v173
    %225 = vmatprep.subr.mxu0 %v172
    %226 = vmatpush2.msra.mxu0 %v171
    %227 = vmatprep.subr.mxu0 %v170
    %228 = vmatpush2.msra.mxu0 %v169
    %229 = vmatprep.subr.mxu0 %v168
    %230 = vmatpush2.msra.mxu0 %v167
    %231 = vmatprep.subr.mxu0 %v166
    %232 = vmatpush2.msra.mxu0 %v165
    %233 = vmatprep.subr.mxu0 %v164
    %234 = vmatpush2.msra.mxu0 %v163
    %235 = vmatprep.subr.mxu0 %v162
    %236 = vmatpush2.msra.mxu0 %v161
    %237 = vmatprep.subr.mxu0 %v160
    %238 = vmatpush2.msra.mxu0 %v159
    %239 = vmatprep.subr.mxu0 %v158
    %240 = vmatpush2.msra.mxu0 %v157
    %241 = vmatprep.subr.mxu0 %v156
    %242 = vmatpush2.msra.mxu0 %v155
    %243 = vmatprep.subr.mxu0 %v154
    %244 = vmatpush2.msra.mxu0 %v153
    %245 = vmatprep.subr.mxu0 %v152
    %246 = vmatpush2.msra.mxu0 %v151
    %247 = vmatprep.subr.mxu0 %v150
    %248 = vmatpush2.msra.mxu0 %v149
    %249 = vmatprep.subr.mxu0 %v148
    %250 = vmatpush2.msra.mxu0 %v147
    %251 = vmatprep.subr.mxu0 %v146
    %252 = vmatpush2.msra.mxu0 %v145
    %253 = vmatprep.mubr.f32.mxu0 %v112
    %254 = vmatmul.mubr.f32.gmra.mxu0 %v111
    %v255 = vpop.f32.mrf.mxu0
    %v256 = vadd.f32 %v182, %v255
    %v257 = vpop.f32.mrf.mxu0
    %v258 = vadd.f32 %v186, %v257
    %259 = vdwg.mxu0
    %v260 = vld [vmem:[#allocation7] sm:$0xff]
    %v261 = vld [vmem:[#allocation7 + $0x8] sm:$0xff]
    %v262 = vld [vmem:[#allocation7 + $0x10] sm:$0xff]
    %v263 = vld [vmem:[#allocation7 + $0x18] sm:$0xff]
    %v264 = vld [vmem:[#allocation7 + $0x20] sm:$0xff]
    %v265 = vld [vmem:[#allocation7 + $0x28] sm:$0xff]
    %v266 = vld [vmem:[#allocation7 + $0x30] sm:$0xff]
    %v267 = vld [vmem:[#allocation7 + $0x38] sm:$0xff]
    %v268 = vld [vmem:[#allocation7 + $0x40] sm:$0xff]
    %v269 = vld [vmem:[#allocation7 + $0x48] sm:$0xff]
    %v270 = vld [vmem:[#allocation7 + $0x50] sm:$0xff]
    %v271 = vld [vmem:[#allocation7 + $0x58] sm:$0xff]
    %v272 = vld [vmem:[#allocation7 + $0x60] sm:$0xff]
    %v273 = vld [vmem:[#allocation7 + $0x68] sm:$0xff]
    %v274 = vld [vmem:[#allocation7 + $0x70] sm:$0xff]
    %v275 = vld [vmem:[#allocation7 + $0x78] sm:$0xff]
    %v276 = vld [vmem:[#allocation7 + $0x80] sm:$0xff]
    %v277 = vld [vmem:[#allocation7 + $0x88] sm:$0xff]
    %v278 = vld [vmem:[#allocation7 + $0x90] sm:$0xff]
    %v279 = vld [vmem:[#allocation7 + $0x98] sm:$0xff]
    %v280 = vld [vmem:[#allocation7 + $0xa0] sm:$0xff]
    %v281 = vld [vmem:[#allocation7 + $0xa8] sm:$0xff]
    %v282 = vld [vmem:[#allocation7 + $0xb0] sm:$0xff]
    %v283 = vld [vmem:[#allocation7 + $0xb8] sm:$0xff]
    %v284 = vld [vmem:[#allocation7 + $0xc0] sm:$0xff]
    %v285 = vld [vmem:[#allocation7 + $0xc8] sm:$0xff]
    %v286 = vld [vmem:[#allocation7 + $0xd0] sm:$0xff]
    %v287 = vld [vmem:[#allocation7 + $0xd8] sm:$0xff]
    %v288 = vld [vmem:[#allocation7 + $0xe0] sm:$0xff]
    %v289 = vld [vmem:[#allocation7 + $0xe8] sm:$0xff]
    %v290 = vld [vmem:[#allocation7 + $0xf0] sm:$0xff]
    %v291 = vld [vmem:[#allocation7 + $0xf8] sm:$0xff]
    %v292 = vld [vmem:[#allocation7 + $0x100] sm:$0xff]
    %v293 = vld [vmem:[#allocation7 + $0x108] sm:$0xff]
    %v294 = vld [vmem:[#allocation7 + $0x110] sm:$0xff]
    %v295 = vld [vmem:[#allocation7 + $0x118] sm:$0xff]
    %v296 = vld [vmem:[#allocation7 + $0x120] sm:$0xff]
    %v297 = vld [vmem:[#allocation7 + $0x128] sm:$0xff]
    %v298 = vld [vmem:[#allocation7 + $0x130] sm:$0xff]
    %v299 = vld [vmem:[#allocation7 + $0x138] sm:$0xff]
    %v300 = vld [vmem:[#allocation7 + $0x140] sm:$0xff]
    %v301 = vld [vmem:[#allocation7 + $0x148] sm:$0xff]
    %v302 = vld [vmem:[#allocation7 + $0x150] sm:$0xff]
    %v303 = vld [vmem:[#allocation7 + $0x158] sm:$0xff]
    %v304 = vld [vmem:[#allocation7 + $0x160] sm:$0xff]
    %v305 = vld [vmem:[#allocation7 + $0x168] sm:$0xff]
    %v306 = vld [vmem:[#allocation7 + $0x170] sm:$0xff]
    %v307 = vld [vmem:[#allocation7 + $0x178] sm:$0xff]
    %v308 = vld [vmem:[#allocation7 + $0x180] sm:$0xff]
    %v309 = vld [vmem:[#allocation7 + $0x188] sm:$0xff]
    %v310 = vld [vmem:[#allocation7 + $0x190] sm:$0xff]
    %v311 = vld [vmem:[#allocation7 + $0x198] sm:$0xff]
    %v312 = vld [vmem:[#allocation7 + $0x1a0] sm:$0xff]
    %v313 = vld [vmem:[#allocation7 + $0x1a8] sm:$0xff]
    %v314 = vld [vmem:[#allocation7 + $0x1b0] sm:$0xff]
    %v315 = vld [vmem:[#allocation7 + $0x1b8] sm:$0xff]
    %v316 = vld [vmem:[#allocation7 + $0x1c0] sm:$0xff]
    %v317 = vld [vmem:[#allocation7 + $0x1c8] sm:$0xff]
    %v318 = vld [vmem:[#allocation7 + $0x1d0] sm:$0xff]
    %v319 = vld [vmem:[#allocation7 + $0x1d8] sm:$0xff]
    %v320 = vld [vmem:[#allocation7 + $0x1e0] sm:$0xff]
    %v321 = vld [vmem:[#allocation7 + $0x1e8] sm:$0xff]
    %v322 = vld [vmem:[#allocation7 + $0x1f0] sm:$0xff]
    %v323 = vld [vmem:[#allocation7 + $0x1f8] sm:$0xff]
    %v324 = vld [vmem:[#allocation8] sm:$0x3]
    %v326 = vlaneseq
    %v327 = vshrl.u32 %v326, 7
    %v328 = vsub.s32 0, %v327
    %v329 = vrot.slane %v324, %v328
    %v330 = vlaneseq
    %v331 = vshrl.u32 %v330, 7
    %v332 = vsub.s32 1, %v331
    %v333 = vrot.slane %v324, %v332
    %336 = vmatprep.subr.mxu0 %v291
    %337 = vmatpush1.msra.mxu0 %v290
    %338 = vmatprep.subr.mxu0 %v289
    %339 = vmatpush1.msra.mxu0 %v288
    %340 = vmatprep.subr.mxu0 %v287
    %341 = vmatpush1.msra.mxu0 %v286
    %342 = vmatprep.subr.mxu0 %v285
    %343 = vmatpush1.msra.mxu0 %v284
    %344 = vmatprep.subr.mxu0 %v283
    %345 = vmatpush1.msra.mxu0 %v282
    %346 = vmatprep.subr.mxu0 %v281
    %347 = vmatpush1.msra.mxu0 %v280
    %348 = vmatprep.subr.mxu0 %v279
    %349 = vmatpush1.msra.mxu0 %v278
    %350 = vmatprep.subr.mxu0 %v277
    %351 = vmatpush1.msra.mxu0 %v276
    %352 = vmatprep.subr.mxu0 %v275
    %353 = vmatpush1.msra.mxu0 %v274
    %354 = vmatprep.subr.mxu0 %v273
    %355 = vmatpush1.msra.mxu0 %v272
    %356 = vmatprep.subr.mxu0 %v271
    %357 = vmatpush1.msra.mxu0 %v270
    %358 = vmatprep.subr.mxu0 %v269
    %359 = vmatpush1.msra.mxu0 %v268
    %360 = vmatprep.subr.mxu0 %v267
    %361 = vmatpush1.msra.mxu0 %v266
    %362 = vmatprep.subr.mxu0 %v265
    %363 = vmatpush1.msra.mxu0 %v264
    %364 = vmatprep.subr.mxu0 %v263
    %365 = vmatpush1.msra.mxu0 %v262
    %366 = vmatprep.subr.mxu0 %v261
    %367 = vmatpush1.msra.mxu0 %v260
    %368 = vmatprep.subr.mxu0 %v323
    %369 = vmatpush2.msra.mxu0 %v322
    %370 = vmatprep.subr.mxu0 %v321
    %371 = vmatpush2.msra.mxu0 %v320
    %372 = vmatprep.subr.mxu0 %v319
    %373 = vmatpush2.msra.mxu0 %v318
    %374 = vmatprep.subr.mxu0 %v317
    %375 = vmatpush2.msra.mxu0 %v316
    %376 = vmatprep.subr.mxu0 %v315
    %377 = vmatpush2.msra.mxu0 %v314
    %378 = vmatprep.subr.mxu0 %v313
    %379 = vmatpush2.msra.mxu0 %v312
    %380 = vmatprep.subr.mxu0 %v311
    %381 = vmatpush2.msra.mxu0 %v310
    %382 = vmatprep.subr.mxu0 %v309
    %383 = vmatpush2.msra.mxu0 %v308
    %384 = vmatprep.subr.mxu0 %v307
    %385 = vmatpush2.msra.mxu0 %v306
    %386 = vmatprep.subr.mxu0 %v305
    %387 = vmatpush2.msra.mxu0 %v304
    %388 = vmatprep.subr.mxu0 %v303
    %389 = vmatpush2.msra.mxu0 %v302
    %390 = vmatprep.subr.mxu0 %v301
    %391 = vmatpush2.msra.mxu0 %v300
    %392 = vmatprep.subr.mxu0 %v299
    %393 = vmatpush2.msra.mxu0 %v298
    %394 = vmatprep.subr.mxu0 %v297
    %395 = vmatpush2.msra.mxu0 %v296
    %396 = vmatprep.subr.mxu0 %v295
    %397 = vmatpush2.msra.mxu0 %v294
    %398 = vmatprep.subr.mxu0 %v293
    %399 = vmatpush2.msra.mxu0 %v292
    %400 = vmatprep.mubr.f32.mxu0 %v258
    %401 = vmatmul.mubr.f32.gmra.mxu0 %v256
    %v402 = vpop.f32.mrf.mxu0
    %v403 = vadd.f32 %v329, %v402
    %v404 = vpop.f32.mrf.mxu0
    %v405 = vadd.f32 %v333, %v404
    %406 = vdwg.mxu0
    %v407 = vld [vmem:[#allocation10] sm:$0xff]
    %v408 = vld [vmem:[#allocation10 + $0x8] sm:$0xff]
    %v409 = vld [vmem:[#allocation10 + $0x10] sm:$0xff]
    %v410 = vld [vmem:[#allocation10 + $0x18] sm:$0xff]
    %v411 = vld [vmem:[#allocation10 + $0x20] sm:$0xff]
    %v412 = vld [vmem:[#allocation10 + $0x28] sm:$0xff]
    %v413 = vld [vmem:[#allocation10 + $0x30] sm:$0xff]
    %v414 = vld [vmem:[#allocation10 + $0x38] sm:$0xff]
    %v415 = vld [vmem:[#allocation10 + $0x40] sm:$0xff]
    %v416 = vld [vmem:[#allocation10 + $0x48] sm:$0xff]
    %v417 = vld [vmem:[#allocation10 + $0x50] sm:$0xff]
    %v418 = vld [vmem:[#allocation10 + $0x58] sm:$0xff]
    %v419 = vld [vmem:[#allocation10 + $0x60] sm:$0xff]
    %v420 = vld [vmem:[#allocation10 + $0x68] sm:$0xff]
    %v421 = vld [vmem:[#allocation10 + $0x70] sm:$0xff]
    %v422 = vld [vmem:[#allocation10 + $0x78] sm:$0xff]
    %v423 = vld [vmem:[#allocation10 + $0x80] sm:$0xff]
    %v424 = vld [vmem:[#allocation10 + $0x88] sm:$0xff]
    %v425 = vld [vmem:[#allocation10 + $0x90] sm:$0xff]
    %v426 = vld [vmem:[#allocation10 + $0x98] sm:$0xff]
    %v427 = vld [vmem:[#allocation10 + $0xa0] sm:$0xff]
    %v428 = vld [vmem:[#allocation10 + $0xa8] sm:$0xff]
    %v429 = vld [vmem:[#allocation10 + $0xb0] sm:$0xff]
    %v430 = vld [vmem:[#allocation10 + $0xb8] sm:$0xff]
    %v431 = vld [vmem:[#allocation10 + $0xc0] sm:$0xff]
    %v432 = vld [vmem:[#allocation10 + $0xc8] sm:$0xff]
    %v433 = vld [vmem:[#allocation10 + $0xd0] sm:$0xff]
    %v434 = vld [vmem:[#allocation10 + $0xd8] sm:$0xff]
    %v435 = vld [vmem:[#allocation10 + $0xe0] sm:$0xff]
    %v436 = vld [vmem:[#allocation10 + $0xe8] sm:$0xff]
    %v437 = vld [vmem:[#allocation10 + $0xf0] sm:$0xff]
    %v438 = vld [vmem:[#allocation10 + $0xf8] sm:$0xff]
    %v439 = vld [vmem:[#allocation10 + $0x100] sm:$0xff]
    %v440 = vld [vmem:[#allocation10 + $0x108] sm:$0xff]
    %v441 = vld [vmem:[#allocation10 + $0x110] sm:$0xff]
    %v442 = vld [vmem:[#allocation10 + $0x118] sm:$0xff]
    %v443 = vld [vmem:[#allocation10 + $0x120] sm:$0xff]
    %v444 = vld [vmem:[#allocation10 + $0x128] sm:$0xff]
    %v445 = vld [vmem:[#allocation10 + $0x130] sm:$0xff]
    %v446 = vld [vmem:[#allocation10 + $0x138] sm:$0xff]
    %v447 = vld [vmem:[#allocation10 + $0x140] sm:$0xff]
    %v448 = vld [vmem:[#allocation10 + $0x148] sm:$0xff]
    %v449 = vld [vmem:[#allocation10 + $0x150] sm:$0xff]
    %v450 = vld [vmem:[#allocation10 + $0x158] sm:$0xff]
    %v451 = vld [vmem:[#allocation10 + $0x160] sm:$0xff]
    %v452 = vld [vmem:[#allocation10 + $0x168] sm:$0xff]
    %v453 = vld [vmem:[#allocation10 + $0x170] sm:$0xff]
    %v454 = vld [vmem:[#allocation10 + $0x178] sm:$0xff]
    %v455 = vld [vmem:[#allocation10 + $0x180] sm:$0xff]
    %v456 = vld [vmem:[#allocation10 + $0x188] sm:$0xff]
    %v457 = vld [vmem:[#allocation10 + $0x190] sm:$0xff]
    %v458 = vld [vmem:[#allocation10 + $0x198] sm:$0xff]
    %v459 = vld [vmem:[#allocation10 + $0x1a0] sm:$0xff]
    %v460 = vld [vmem:[#allocation10 + $0x1a8] sm:$0xff]
    %v461 = vld [vmem:[#allocation10 + $0x1b0] sm:$0xff]
    %v462 = vld [vmem:[#allocation10 + $0x1b8] sm:$0xff]
    %v463 = vld [vmem:[#allocation10 + $0x1c0] sm:$0xff]
    %v464 = vld [vmem:[#allocation10 + $0x1c8] sm:$0xff]
    %v465 = vld [vmem:[#allocation10 + $0x1d0] sm:$0xff]
    %v466 = vld [vmem:[#allocation10 + $0x1d8] sm:$0xff]
    %v467 = vld [vmem:[#allocation10 + $0x1e0] sm:$0xff]
    %v468 = vld [vmem:[#allocation10 + $0x1e8] sm:$0xff]
    %v469 = vld [vmem:[#allocation10 + $0x1f0] sm:$0xff]
    %v470 = vld [vmem:[#allocation10 + $0x1f8] sm:$0xff]
    %v471 = vld [vmem:[#allocation10 + $0x200] sm:$0xff]
    %v472 = vld [vmem:[#allocation10 + $0x208] sm:$0xff]
    %v473 = vld [vmem:[#allocation10 + $0x210] sm:$0xff]
    %v474 = vld [vmem:[#allocation10 + $0x218] sm:$0xff]
    %v475 = vld [vmem:[#allocation10 + $0x220] sm:$0xff]
    %v476 = vld [vmem:[#allocation10 + $0x228] sm:$0xff]
    %v477 = vld [vmem:[#allocation10 + $0x230] sm:$0xff]
    %v478 = vld [vmem:[#allocation10 + $0x238] sm:$0xff]
    %v479 = vld [vmem:[#allocation10 + $0x240] sm:$0xff]
    %v480 = vld [vmem:[#allocation10 + $0x248] sm:$0xff]
    %v481 = vld [vmem:[#allocation10 + $0x250] sm:$0xff]
    %v482 = vld [vmem:[#allocation10 + $0x258] sm:$0xff]
    %v483 = vld [vmem:[#allocation10 + $0x260] sm:$0xff]
    %v484 = vld [vmem:[#allocation10 + $0x268] sm:$0xff]
    %v485 = vld [vmem:[#allocation10 + $0x270] sm:$0xff]
    %v486 = vld [vmem:[#allocation10 + $0x278] sm:$0xff]
    %v487 = vld [vmem:[#allocation10 + $0x280] sm:$0xff]
    %v488 = vld [vmem:[#allocation10 + $0x288] sm:$0xff]
    %v489 = vld [vmem:[#allocation10 + $0x290] sm:$0xff]
    %v490 = vld [vmem:[#allocation10 + $0x298] sm:$0xff]
    %v491 = vld [vmem:[#allocation10 + $0x2a0] sm:$0xff]
    %v492 = vld [vmem:[#allocation10 + $0x2a8] sm:$0xff]
    %v493 = vld [vmem:[#allocation10 + $0x2b0] sm:$0xff]
    %v494 = vld [vmem:[#allocation10 + $0x2b8] sm:$0xff]
    %v495 = vld [vmem:[#allocation10 + $0x2c0] sm:$0xff]
    %v496 = vld [vmem:[#allocation10 + $0x2c8] sm:$0xff]
    %v497 = vld [vmem:[#allocation10 + $0x2d0] sm:$0xff]
    %v498 = vld [vmem:[#allocation10 + $0x2d8] sm:$0xff]
    %v499 = vld [vmem:[#allocation10 + $0x2e0] sm:$0xff]
    %v500 = vld [vmem:[#allocation10 + $0x2e8] sm:$0xff]
    %v501 = vld [vmem:[#allocation10 + $0x2f0] sm:$0xff]
    %v502 = vld [vmem:[#allocation10 + $0x2f8] sm:$0xff]
    %v503 = vld [vmem:[#allocation10 + $0x300] sm:$0xff]
    %v504 = vld [vmem:[#allocation10 + $0x308] sm:$0xff]
    %v505 = vld [vmem:[#allocation10 + $0x310] sm:$0xff]
    %v506 = vld [vmem:[#allocation10 + $0x318] sm:$0xff]
    %v507 = vld [vmem:[#allocation10 + $0x320] sm:$0xff]
    %v508 = vld [vmem:[#allocation10 + $0x328] sm:$0xff]
    %v509 = vld [vmem:[#allocation10 + $0x330] sm:$0xff]
    %v510 = vld [vmem:[#allocation10 + $0x338] sm:$0xff]
    %v511 = vld [vmem:[#allocation10 + $0x340] sm:$0xff]
    %v512 = vld [vmem:[#allocation10 + $0x348] sm:$0xff]
    %v513 = vld [vmem:[#allocation10 + $0x350] sm:$0xff]
    %v514 = vld [vmem:[#allocation10 + $0x358] sm:$0xff]
    %v515 = vld [vmem:[#allocation10 + $0x360] sm:$0xff]
    %v516 = vld [vmem:[#allocation10 + $0x368] sm:$0xff]
    %v517 = vld [vmem:[#allocation10 + $0x370] sm:$0xff]
    %v518 = vld [vmem:[#allocation10 + $0x378] sm:$0xff]
    %v519 = vld [vmem:[#allocation10 + $0x380] sm:$0xff]
    %v520 = vld [vmem:[#allocation10 + $0x388] sm:$0xff]
    %v521 = vld [vmem:[#allocation10 + $0x390] sm:$0xff]
    %v522 = vld [vmem:[#allocation10 + $0x398] sm:$0xff]
    %v523 = vld [vmem:[#allocation10 + $0x3a0] sm:$0xff]
    %v524 = vld [vmem:[#allocation10 + $0x3a8] sm:$0xff]
    %v525 = vld [vmem:[#allocation10 + $0x3b0] sm:$0xff]
    %v526 = vld [vmem:[#allocation10 + $0x3b8] sm:$0xff]
    %v527 = vld [vmem:[#allocation10 + $0x3c0] sm:$0xff]
    %v528 = vld [vmem:[#allocation10 + $0x3c8] sm:$0xff]
    %v529 = vld [vmem:[#allocation10 + $0x3d0] sm:$0xff]
    %v530 = vld [vmem:[#allocation10 + $0x3d8] sm:$0xff]
    %v531 = vld [vmem:[#allocation10 + $0x3e0] sm:$0xff]
    %v532 = vld [vmem:[#allocation10 + $0x3e8] sm:$0xff]
    %v533 = vld [vmem:[#allocation10 + $0x3f0] sm:$0xff]
    %v534 = vld [vmem:[#allocation10 + $0x3f8] sm:$0xff]
    %v535 = vld [vmem:[%s6] sm:$0xf]
    %v537 = vlaneseq
    %v538 = vshrl.u32 %v537, 7
    %v539 = vsub.s32 0, %v538
    %v540 = vrot.slane %v535, %v539
    %v541 = vlaneseq
    %v542 = vshrl.u32 %v541, 7
    %v543 = vsub.s32 1, %v542
    %v544 = vrot.slane %v535, %v543
    %v545 = vlaneseq
    %v546 = vshrl.u32 %v545, 7
    %v547 = vsub.s32 2, %v546
    %v548 = vrot.slane %v535, %v547
    %v549 = vlaneseq
    %v550 = vshrl.u32 %v549, 7
    %v551 = vsub.s32 3, %v550
    %v552 = vrot.slane %v535, %v551
    %557 = vmatprep.subr.mxu0 %v468
    %558 = vmatpush1.msra.mxu0 %v467
    %559 = vmatprep.subr.mxu0 %v464
    %560 = vmatpush1.msra.mxu0 %v463
    %561 = vmatprep.subr.mxu0 %v460
    %562 = vmatpush1.msra.mxu0 %v459
    %563 = vmatprep.subr.mxu0 %v456
    %564 = vmatpush1.msra.mxu0 %v455
    %565 = vmatprep.subr.mxu0 %v452
    %566 = vmatpush1.msra.mxu0 %v451
    %567 = vmatprep.subr.mxu0 %v448
    %568 = vmatpush1.msra.mxu0 %v447
    %569 = vmatprep.subr.mxu0 %v444
    %570 = vmatpush1.msra.mxu0 %v443
    %571 = vmatprep.subr.mxu0 %v440
    %572 = vmatpush1.msra.mxu0 %v439
    %573 = vmatprep.subr.mxu0 %v436
    %574 = vmatpush1.msra.mxu0 %v435
    %575 = vmatprep.subr.mxu0 %v432
    %576 = vmatpush1.msra.mxu0 %v431
    %577 = vmatprep.subr.mxu0 %v428
    %578 = vmatpush1.msra.mxu0 %v427
    %579 = vmatprep.subr.mxu0 %v424
    %580 = vmatpush1.msra.mxu0 %v423
    %581 = vmatprep.subr.mxu0 %v420
    %582 = vmatpush1.msra.mxu0 %v419
    %583 = vmatprep.subr.mxu0 %v416
    %584 = vmatpush1.msra.mxu0 %v415
    %585 = vmatprep.subr.mxu0 %v412
    %586 = vmatpush1.msra.mxu0 %v411
    %587 = vmatprep.subr.mxu0 %v408
    %588 = vmatpush1.msra.mxu0 %v407
    %589 = vmatprep.subr.mxu0 %v532
    %590 = vmatpush2.msra.mxu0 %v531
    %591 = vmatprep.subr.mxu0 %v528
    %592 = vmatpush2.msra.mxu0 %v527
    %593 = vmatprep.subr.mxu0 %v524
    %594 = vmatpush2.msra.mxu0 %v523
    %595 = vmatprep.subr.mxu0 %v520
    %596 = vmatpush2.msra.mxu0 %v519
    %597 = vmatprep.subr.mxu0 %v516
    %598 = vmatpush2.msra.mxu0 %v515
    %599 = vmatprep.subr.mxu0 %v512
    %600 = vmatpush2.msra.mxu0 %v511
    %601 = vmatprep.subr.mxu0 %v508
    %602 = vmatpush2.msra.mxu0 %v507
    %603 = vmatprep.subr.mxu0 %v504
    %604 = vmatpush2.msra.mxu0 %v503
    %605 = vmatprep.subr.mxu0 %v500
    %606 = vmatpush2.msra.mxu0 %v499
    %607 = vmatprep.subr.mxu0 %v496
    %608 = vmatpush2.msra.mxu0 %v495
    %609 = vmatprep.subr.mxu0 %v492
    %610 = vmatpush2.msra.mxu0 %v491
    %611 = vmatprep.subr.mxu0 %v488
    %612 = vmatpush2.msra.mxu0 %v487
    %613 = vmatprep.subr.mxu0 %v484
    %614 = vmatpush2.msra.mxu0 %v483
    %615 = vmatprep.subr.mxu0 %v480
    %616 = vmatpush2.msra.mxu0 %v479
    %617 = vmatprep.subr.mxu0 %v476
    %618 = vmatpush2.msra.mxu0 %v475
    %619 = vmatprep.subr.mxu0 %v472
    %620 = vmatpush2.msra.mxu0 %v471
    %621 = vmatprep.mubr.f32.mxu0 %v405
    %622 = vmatmul.mubr.f32.gmra.mxu0 %v403
    %v623 = vpop.f32.mrf.mxu0
    %v624 = vadd.f32 %v540, %v623
    %v625 = vpop.f32.mrf.mxu0
    %v626 = vadd.f32 %v544, %v625
    %627 = vdwg.mxu0
    %628 = vmatprep.subr.mxu0 %v470
    %629 = vmatpush1.msra.mxu0 %v469
    %630 = vmatprep.subr.mxu0 %v466
    %631 = vmatpush1.msra.mxu0 %v465
    %632 = vmatprep.subr.mxu0 %v462
    %633 = vmatpush1.msra.mxu0 %v461
    %634 = vmatprep.subr.mxu0 %v458
    %635 = vmatpush1.msra.mxu0 %v457
    %636 = vmatprep.subr.mxu0 %v454
    %637 = vmatpush1.msra.mxu0 %v453
    %638 = vmatprep.subr.mxu0 %v450
    %639 = vmatpush1.msra.mxu0 %v449
    %640 = vmatprep.subr.mxu0 %v446
    %641 = vmatpush1.msra.mxu0 %v445
    %642 = vmatprep.subr.mxu0 %v442
    %643 = vmatpush1.msra.mxu0 %v441
    %644 = vmatprep.subr.mxu0 %v438
    %645 = vmatpush1.msra.mxu0 %v437
    %646 = vmatprep.subr.mxu0 %v434
    %647 = vmatpush1.msra.mxu0 %v433
    %648 = vmatprep.subr.mxu0 %v430
    %649 = vmatpush1.msra.mxu0 %v429
    %650 = vmatprep.subr.mxu0 %v426
    %651 = vmatpush1.msra.mxu0 %v425
    %652 = vmatprep.subr.mxu0 %v422
    %653 = vmatpush1.msra.mxu0 %v421
    %654 = vmatprep.subr.mxu0 %v418
    %655 = vmatpush1.msra.mxu0 %v417
    %656 = vmatprep.subr.mxu0 %v414
    %657 = vmatpush1.msra.mxu0 %v413
    %658 = vmatprep.subr.mxu0 %v410
    %659 = vmatpush1.msra.mxu0 %v409
    %660 = vmatprep.subr.mxu0 %v534
    %661 = vmatpush2.msra.mxu0 %v533
    %662 = vmatprep.subr.mxu0 %v530
    %663 = vmatpush2.msra.mxu0 %v529
    %664 = vmatprep.subr.mxu0 %v526
    %665 = vmatpush2.msra.mxu0 %v525
    %666 = vmatprep.subr.mxu0 %v522
    %667 = vmatpush2.msra.mxu0 %v521
    %668 = vmatprep.subr.mxu0 %v518
    %669 = vmatpush2.msra.mxu0 %v517
    %670 = vmatprep.subr.mxu0 %v514
    %671 = vmatpush2.msra.mxu0 %v513
    %672 = vmatprep.subr.mxu0 %v510
    %673 = vmatpush2.msra.mxu0 %v509
    %674 = vmatprep.subr.mxu0 %v506
    %675 = vmatpush2.msra.mxu0 %v505
    %676 = vmatprep.subr.mxu0 %v502
    %677 = vmatpush2.msra.mxu0 %v501
    %678 = vmatprep.subr.mxu0 %v498
    %679 = vmatpush2.msra.mxu0 %v497
    %680 = vmatprep.subr.mxu0 %v494
    %681 = vmatpush2.msra.mxu0 %v493
    %682 = vmatprep.subr.mxu0 %v490
    %683 = vmatpush2.msra.mxu0 %v489
    %684 = vmatprep.subr.mxu0 %v486
    %685 = vmatpush2.msra.mxu0 %v485
    %686 = vmatprep.subr.mxu0 %v482
    %687 = vmatpush2.msra.mxu0 %v481
    %688 = vmatprep.subr.mxu0 %v478
    %689 = vmatpush2.msra.mxu0 %v477
    %690 = vmatprep.subr.mxu0 %v474
    %691 = vmatpush2.msra.mxu0 %v473
    %692 = vmatprep.mubr.f32.mxu0 %v405
    %693 = vmatmul.mubr.f32.gmra.mxu0 %v403
    %v694 = vpop.f32.mrf.mxu0
    %v695 = vadd.f32 %v548, %v694
    %v696 = vpop.f32.mrf.mxu0
    %v697 = vadd.f32 %v552, %v696
    %698 = vdwg.mxu0
    %v699 = vld [vmem:[#allocation11] sm:$0xff]
    %v700 = vld [vmem:[#allocation11 + $0x8] sm:$0xff]
    %v701 = vld [vmem:[#allocation11 + $0x10] sm:$0xff]
    %v702 = vld [vmem:[#allocation11 + $0x18] sm:$0xff]
    %v703 = vld [vmem:[#allocation11 + $0x20] sm:$0xff]
    %v704 = vld [vmem:[#allocation11 + $0x28] sm:$0xff]
    %v705 = vld [vmem:[#allocation11 + $0x30] sm:$0xff]
    %v706 = vld [vmem:[#allocation11 + $0x38] sm:$0xff]
    %v707 = vld [vmem:[#allocation11 + $0x40] sm:$0xff]
    %v708 = vld [vmem:[#allocation11 + $0x48] sm:$0xff]
    %v709 = vld [vmem:[#allocation11 + $0x50] sm:$0xff]
    %v710 = vld [vmem:[#allocation11 + $0x58] sm:$0xff]
    %v711 = vld [vmem:[#allocation11 + $0x60] sm:$0xff]
    %v712 = vld [vmem:[#allocation11 + $0x68] sm:$0xff]
    %v713 = vld [vmem:[#allocation11 + $0x70] sm:$0xff]
    %v714 = vld [vmem:[#allocation11 + $0x78] sm:$0xff]
    %v715 = vld [vmem:[#allocation11 + $0x80] sm:$0xff]
    %v716 = vld [vmem:[#allocation11 + $0x88] sm:$0xff]
    %v717 = vld [vmem:[#allocation11 + $0x90] sm:$0xff]
    %v718 = vld [vmem:[#allocation11 + $0x98] sm:$0xff]
    %v719 = vld [vmem:[#allocation11 + $0xa0] sm:$0xff]
    %v720 = vld [vmem:[#allocation11 + $0xa8] sm:$0xff]
    %v721 = vld [vmem:[#allocation11 + $0xb0] sm:$0xff]
    %v722 = vld [vmem:[#allocation11 + $0xb8] sm:$0xff]
    %v723 = vld [vmem:[#allocation11 + $0xc0] sm:$0xff]
    %v724 = vld [vmem:[#allocation11 + $0xc8] sm:$0xff]
    %v725 = vld [vmem:[#allocation11 + $0xd0] sm:$0xff]
    %v726 = vld [vmem:[#allocation11 + $0xd8] sm:$0xff]
    %v727 = vld [vmem:[#allocation11 + $0xe0] sm:$0xff]
    %v728 = vld [vmem:[#allocation11 + $0xe8] sm:$0xff]
    %v729 = vld [vmem:[#allocation11 + $0xf0] sm:$0xff]
    %v730 = vld [vmem:[#allocation11 + $0xf8] sm:$0xff]
    %v731 = vld [vmem:[#allocation11 + $0x100] sm:$0xff]
    %v732 = vld [vmem:[#allocation11 + $0x108] sm:$0xff]
    %v733 = vld [vmem:[#allocation11 + $0x110] sm:$0xff]
    %v734 = vld [vmem:[#allocation11 + $0x118] sm:$0xff]
    %v735 = vld [vmem:[#allocation11 + $0x120] sm:$0xff]
    %v736 = vld [vmem:[#allocation11 + $0x128] sm:$0xff]
    %v737 = vld [vmem:[#allocation11 + $0x130] sm:$0xff]
    %v738 = vld [vmem:[#allocation11 + $0x138] sm:$0xff]
    %v739 = vld [vmem:[#allocation11 + $0x140] sm:$0xff]
    %v740 = vld [vmem:[#allocation11 + $0x148] sm:$0xff]
    %v741 = vld [vmem:[#allocation11 + $0x150] sm:$0xff]
    %v742 = vld [vmem:[#allocation11 + $0x158] sm:$0xff]
    %v743 = vld [vmem:[#allocation11 + $0x160] sm:$0xff]
    %v744 = vld [vmem:[#allocation11 + $0x168] sm:$0xff]
    %v745 = vld [vmem:[#allocation11 + $0x170] sm:$0xff]
    %v746 = vld [vmem:[#allocation11 + $0x178] sm:$0xff]
    %v747 = vld [vmem:[#allocation11 + $0x180] sm:$0xff]
    %v748 = vld [vmem:[#allocation11 + $0x188] sm:$0xff]
    %v749 = vld [vmem:[#allocation11 + $0x190] sm:$0xff]
    %v750 = vld [vmem:[#allocation11 + $0x198] sm:$0xff]
    %v751 = vld [vmem:[#allocation11 + $0x1a0] sm:$0xff]
    %v752 = vld [vmem:[#allocation11 + $0x1a8] sm:$0xff]
    %v753 = vld [vmem:[#allocation11 + $0x1b0] sm:$0xff]
    %v754 = vld [vmem:[#allocation11 + $0x1b8] sm:$0xff]
    %v755 = vld [vmem:[#allocation11 + $0x1c0] sm:$0xff]
    %v756 = vld [vmem:[#allocation11 + $0x1c8] sm:$0xff]
    %v757 = vld [vmem:[#allocation11 + $0x1d0] sm:$0xff]
    %v758 = vld [vmem:[#allocation11 + $0x1d8] sm:$0xff]
    %v759 = vld [vmem:[#allocation11 + $0x1e0] sm:$0xff]
    %v760 = vld [vmem:[#allocation11 + $0x1e8] sm:$0xff]
    %v761 = vld [vmem:[#allocation11 + $0x1f0] sm:$0xff]
    %v762 = vld [vmem:[#allocation11 + $0x1f8] sm:$0xff]
    %v763 = vld [vmem:[%s8] sm:$0x1]
    %v765 = vlaneseq
    %v766 = vshrl.u32 %v765, 7
    %v767 = vsub.s32 0, %v766
    %v768 = vrot.slane %v763, %v767
    %770 = vmatprep.subr.mxu0 0.0
    %771 = vmatpush1.msra.mxu0 %v714
    %772 = vmatprep.subr.mxu0 0.0
    %773 = vmatpush1.msra.mxu0 %v713
    %774 = vmatprep.subr.mxu0 0.0
    %775 = vmatpush1.msra.mxu0 %v712
    %776 = vmatprep.subr.mxu0 0.0
    %777 = vmatpush1.msra.mxu0 %v711
    %778 = vmatprep.subr.mxu0 0.0
    %779 = vmatpush1.msra.mxu0 %v710
    %780 = vmatprep.subr.mxu0 0.0
    %781 = vmatpush1.msra.mxu0 %v709
    %782 = vmatprep.subr.mxu0 0.0
    %783 = vmatpush1.msra.mxu0 %v708
    %784 = vmatprep.subr.mxu0 0.0
    %785 = vmatpush1.msra.mxu0 %v707
    %786 = vmatprep.subr.mxu0 0.0
    %787 = vmatpush1.msra.mxu0 %v706
    %788 = vmatprep.subr.mxu0 0.0
    %789 = vmatpush1.msra.mxu0 %v705
    %790 = vmatprep.subr.mxu0 0.0
    %791 = vmatpush1.msra.mxu0 %v704
    %792 = vmatprep.subr.mxu0 0.0
    %793 = vmatpush1.msra.mxu0 %v703
    %794 = vmatprep.subr.mxu0 0.0
    %795 = vmatpush1.msra.mxu0 %v702
    %796 = vmatprep.subr.mxu0 0.0
    %797 = vmatpush1.msra.mxu0 %v701
    %798 = vmatprep.subr.mxu0 0.0
    %799 = vmatpush1.msra.mxu0 %v700
    %800 = vmatprep.subr.mxu0 0.0
    %801 = vmatpush1.msra.mxu0 %v699
    %802 = vmatprep.subr.mxu0 0.0
    %803 = vmatpush2.msra.mxu0 %v730
    %804 = vmatprep.subr.mxu0 0.0
    %805 = vmatpush2.msra.mxu0 %v729
    %806 = vmatprep.subr.mxu0 0.0
    %807 = vmatpush2.msra.mxu0 %v728
    %808 = vmatprep.subr.mxu0 0.0
    %809 = vmatpush2.msra.mxu0 %v727
    %810 = vmatprep.subr.mxu0 0.0
    %811 = vmatpush2.msra.mxu0 %v726
    %812 = vmatprep.subr.mxu0 0.0
    %813 = vmatpush2.msra.mxu0 %v725
    %814 = vmatprep.subr.mxu0 0.0
    %815 = vmatpush2.msra.mxu0 %v724
    %816 = vmatprep.subr.mxu0 0.0
    %817 = vmatpush2.msra.mxu0 %v723
    %818 = vmatprep.subr.mxu0 0.0
    %819 = vmatpush2.msra.mxu0 %v722
    %820 = vmatprep.subr.mxu0 0.0
    %821 = vmatpush2.msra.mxu0 %v721
    %822 = vmatprep.subr.mxu0 0.0
    %823 = vmatpush2.msra.mxu0 %v720
    %824 = vmatprep.subr.mxu0 0.0
    %825 = vmatpush2.msra.mxu0 %v719
    %826 = vmatprep.subr.mxu0 0.0
    %827 = vmatpush2.msra.mxu0 %v718
    %828 = vmatprep.subr.mxu0 0.0
    %829 = vmatpush2.msra.mxu0 %v717
    %830 = vmatprep.subr.mxu0 0.0
    %831 = vmatpush2.msra.mxu0 %v716
    %832 = vmatprep.subr.mxu0 0.0
    %833 = vmatpush2.msra.mxu0 %v715
    %834 = vmatprep.mubr.f32.mxu0 %v626
    %835 = vmatmul.mubr.f32.gmra.mxu0 %v624
    %v836 = vpop.f32.mrf.mxu0
    %v837 = vadd.f32 %v768, %v836
    %v838 = vpop.f32.mrf.mxu0
    %839 = vdwg.mxu0
    %840 = vmatprep.subr.mxu0 0.0
    %841 = vmatpush1.msra.mxu0 %v746
    %842 = vmatprep.subr.mxu0 0.0
    %843 = vmatpush1.msra.mxu0 %v745
    %844 = vmatprep.subr.mxu0 0.0
    %845 = vmatpush1.msra.mxu0 %v744
    %846 = vmatprep.subr.mxu0 0.0
    %847 = vmatpush1.msra.mxu0 %v743
    %848 = vmatprep.subr.mxu0 0.0
    %849 = vmatpush1.msra.mxu0 %v742
    %850 = vmatprep.subr.mxu0 0.0
    %851 = vmatpush1.msra.mxu0 %v741
    %852 = vmatprep.subr.mxu0 0.0
    %853 = vmatpush1.msra.mxu0 %v740
    %854 = vmatprep.subr.mxu0 0.0
    %855 = vmatpush1.msra.mxu0 %v739
    %856 = vmatprep.subr.mxu0 0.0
    %857 = vmatpush1.msra.mxu0 %v738
    %858 = vmatprep.subr.mxu0 0.0
    %859 = vmatpush1.msra.mxu0 %v737
    %860 = vmatprep.subr.mxu0 0.0
    %861 = vmatpush1.msra.mxu0 %v736
    %862 = vmatprep.subr.mxu0 0.0
    %863 = vmatpush1.msra.mxu0 %v735
    %864 = vmatprep.subr.mxu0 0.0
    %865 = vmatpush1.msra.mxu0 %v734
    %866 = vmatprep.subr.mxu0 0.0
    %867 = vmatpush1.msra.mxu0 %v733
    %868 = vmatprep.subr.mxu0 0.0
    %869 = vmatpush1.msra.mxu0 %v732
    %870 = vmatprep.subr.mxu0 0.0
    %871 = vmatpush1.msra.mxu0 %v731
    %872 = vmatprep.subr.mxu0 0.0
    %873 = vmatpush2.msra.mxu0 %v762
    %874 = vmatprep.subr.mxu0 0.0
    %875 = vmatpush2.msra.mxu0 %v761
    %876 = vmatprep.subr.mxu0 0.0
    %877 = vmatpush2.msra.mxu0 %v760
    %878 = vmatprep.subr.mxu0 0.0
    %879 = vmatpush2.msra.mxu0 %v759
    %880 = vmatprep.subr.mxu0 0.0
    %881 = vmatpush2.msra.mxu0 %v758
    %882 = vmatprep.subr.mxu0 0.0
    %883 = vmatpush2.msra.mxu0 %v757
    %884 = vmatprep.subr.mxu0 0.0
    %885 = vmatpush2.msra.mxu0 %v756
    %886 = vmatprep.subr.mxu0 0.0
    %887 = vmatpush2.msra.mxu0 %v755
    %888 = vmatprep.subr.mxu0 0.0
    %889 = vmatpush2.msra.mxu0 %v754
    %890 = vmatprep.subr.mxu0 0.0
    %891 = vmatpush2.msra.mxu0 %v753
    %892 = vmatprep.subr.mxu0 0.0
    %893 = vmatpush2.msra.mxu0 %v752
    %894 = vmatprep.subr.mxu0 0.0
    %895 = vmatpush2.msra.mxu0 %v751
    %896 = vmatprep.subr.mxu0 0.0
    %897 = vmatpush2.msra.mxu0 %v750
    %898 = vmatprep.subr.mxu0 0.0
    %899 = vmatpush2.msra.mxu0 %v749
    %900 = vmatprep.subr.mxu0 0.0
    %901 = vmatpush2.msra.mxu0 %v748
    %902 = vmatprep.subr.mxu0 0.0
    %903 = vmatpush2.msra.mxu0 %v747
    %904 = vmatprep.mubr.f32.mxu0 %v697
    %905 = vmatmul.mubr.f32.gmra.mxu0 %v695
    %v906 = vpop.f32.mrf.mxu0
    %v907 = vadd.f32 %v837, %v906
    %v908 = vpop.f32.mrf.mxu0
    %909 = vdwg.mxu0
    %910 = vst [vmem:[#allocation13] sm:$0xff] %v907
    // Predicated region
    $region62: #{toy_model_forward.1} parent=1 // pred_check
      _
    $region63: #{toy_model_forward.1} parent=1 // pred_check_branch
      %912 = sbr.rel (0) target = $region65
    $region64: #{toy_model_forward.1} parent=1 // pred_region
      %s914 = ssub.s32 128, 128
      %915 = vsyncadd [#allocation4], %s914
      %s917 = sshll.u32 [#allocation13], 4
      %s918 = int_to_ptr.vmem [resolvable:$true] %s917
      %920 = dma.vmem_to_hbm [thread:$0]  %s918, 128, %s9, [#allocation4]
    $region65: #{toy_model_forward.1} parent=1 // pred_fallthru
      _
    // Predicated region
    $region66: #{toy_model_forward.1} parent=1 // pred_check
      _
    $region67: #{toy_model_forward.1} parent=1 // pred_check_branch
      %922 = sbr.rel (0) target = $region69
    $region68: #{toy_model_forward.1} parent=1 // pred_region
      %923 = dma.done [#allocation4], 128
    $region69: #{toy_model_forward.1} parent=1 // pred_fallthru
      _
    %924 = vsyncpa [#allocation3], 1
    %925 = vsyncpa [#allocation6], 1
    %926 = vsyncpa [#allocation9], 1
    %927 = vsyncpa [#allocation12], 1
    %928 = vsyncpa [#allocation4], 1

</llo_original>
